<compile_context>
chip_gen: v7x
topology: tpu7x:2x2x1
jax: 0.10.0
libtpu: 0.0.40
codegen_flags: <defaults>
</compile_context>

<pallas_src>
import functools
import math

import jax
import jax.numpy as jnp
from jax.experimental import pallas as pl
from jax.experimental.pallas import tpu as pltpu


# ----------------------------- tuning constants ------------------------------

_TARGET_BLOCK_BYTES = 2 << 20        # ~2 MiB per array block (HBM-roofline regime)
_MAX_BLOCK_BYTES = 4 << 20           # hard per-block cap (guards full-extent fallbacks)
_MIN_BLOCK_BYTES = 256 << 10         # never shrink below this chasing grid depth
_MIN_GRID_STEPS = 8                  # enough steps for double-buffering (+ 2 TCs on v7x)
_VMEM_LIMIT_BYTES = 40 << 20         # 3 arrays x 2 bufs x <=4 MiB << 40 MiB; safe on v7x (64 MiB)
_DEFAULT_MIN_PALLAS_BYTES = 4 << 20  # below this a fused XLA add wins (launch overhead)


def _cdiv(a, b):
    return -(-a // b)


# ----------------------------- buffer setup (glue) ---------------------------

def positionalencoding1d(d_model: int, length: int) -> jnp.ndarray:
    """Same semantics as the PyTorch helper: (length, d_model) float32."""
    if d_model % 2 != 0:
        raise ValueError(
            "Cannot use sin/cos positional encoding with odd dim (got dim={:d})".format(d_model)
        )
    position = jnp.arange(0, length, dtype=jnp.float32)[:, None]          # (L, 1)
    div_term = jnp.exp(
        jnp.arange(0, d_model, 2, dtype=jnp.float32) * (-(math.log(10000.0) / d_model))
    )                                                                      # (D/2,)
    pe = jnp.zeros((length, d_model), dtype=jnp.float32)
    pe = pe.at[:, 0::2].set(jnp.sin(position * div_term))
    pe = pe.at[:, 1::2].set(jnp.cos(position * div_term))
    return pe


def make_pe_image(d_model: int, image_size: int) -> jnp.ndarray:
    """pe buffer for image mode: (d_model, H, W), matching permute(2,0,1)."""
    pe = positionalencoding1d(d_model, image_size * image_size)            # (H*W, D)
    pe = pe.reshape(image_size, image_size, d_model)                        # (H, W, D)
    return jnp.transpose(pe, (2, 0, 1))                                     # (D, H, W)


def make_pe_seq(d_model: int, seq_len: int) -> jnp.ndarray:
    """pe buffer for sequence mode: (S, 1, D), matching unsqueeze(1)."""
    return positionalencoding1d(d_model, seq_len)[:, None, :]               # (S, 1, D)


# ----------------------------- Pallas kernels ---------------------------------

def _add_pe_kernel(x_ref, pe_ref, o_ref):
    # pe stays float32; accumulate in f32 (matches torch f32-buffer promotion).
    o_ref[...] = (x_ref[...].astype(jnp.float32) + pe_ref[...]).astype(o_ref.dtype)


def _add_pe_lane_tiled_kernel(x_ref, pe_ref, o_ref, *, reps):
    # x block: (ts, reps*D), pe block: (ts, D).  Replicate pe across the lane
    # axis in-VMEM (lane-aligned copies, free under DMA-bound slack).
    pe_row = pe_ref[...]                                        # (ts, D) float32
    if reps > 1:
        pe_row = jnp.concatenate([pe_row] * reps, axis=-1)      # (ts, reps*D)
    o_ref[...] = (x_ref[...].astype(jnp.float32) + pe_row).astype(o_ref.dtype)


# ----------------------------- tiling helpers ---------------------------------

def _pick_lane_tile(lanes, bytes_per_lane, other_steps):
    """Largest 128-multiple lane tile ~= target, kept deep enough for pipelining.

    Assumes lanes % 128 == 0.
    """
    tn = max(128, (_TARGET_BLOCK_BYTES // max(1, bytes_per_lane)) // 128 * 128)
    tn = min(tn, lanes)
    while (_cdiv(lanes, tn) * other_steps < _MIN_GRID_STEPS
           and tn > 128
           and (tn // 2 // 128 * 128) * bytes_per_lane >= _MIN_BLOCK_BYTES):
        tn = tn // 2 // 128 * 128
    return tn


def _cost(x, pe_f32, out_dtype):
    return pl.CostEstimate(
        flops=x.size,
        transcendentals=0,
        bytes_accessed=int(x.size * jnp.dtype(x.dtype).itemsize
                           + x.size * jnp.dtype(out_dtype).itemsize
                           + pe_f32.size * 4),
    )


# ----------------------------- image-mode wrapper ------------------------------

def positional_encoding_image(x, pe_flat, out_dtype):
    """x: (B, C, H, W), pe_flat: (C, H*W) float32  ->  x + pe (broadcast over B)."""
    B, C, H, W = x.shape
    N = H * W
    assert pe_flat.shape == (C, N)
    out_dtype = jnp.dtype(out_dtype)
    bytes_per = max(jnp.dtype(x.dtype).itemsize, out_dtype.itemsize)
    cost = _cost(x, pe_flat, out_dtype)
    alias = {0: 0} if out_dtype == jnp.dtype(x.dtype) else {}
    cparams = pltpu.CompilerParams(
        dimension_semantics=("parallel", "parallel"),
        vmem_limit_bytes=_VMEM_LIMIT_BYTES,
    )

    if C % 8 == 0 and N % 128 == 0 and C * 128 * bytes_per <= _MAX_BLOCK_BYTES:
        # --- Layout A: (B, C, N); C is a dense sublane dim, lane tiles over N. ---
        x2 = x.reshape(B, C, N)
        pe2 = pe_flat.reshape(1, C, N)
        tn = _pick_lane_tile(N, C * bytes_per, other_steps=B)
        nj = _cdiv(N, tn)
        out = pl.pallas_call(
            _add_pe_kernel,
            out_shape=jax.ShapeDtypeStruct((B, C, N), out_dtype),
            grid=(nj, B),  # lane tiles outer -> pe block index constant over inner batch axis
            in_specs=[
                pl.BlockSpec((1, C, tn), lambda j, b: (b, 0, j)),
                pl.BlockSpec((1, C, tn), lambda j, b: (0, 0, j)),   # pe reused over batch
            ],
            out_specs=pl.BlockSpec((1, C, tn), lambda j, b: (b, 0, j)),
            input_output_aliases=alias,
            cost_estimate=cost,
            compiler_params=cparams,
        )(x2, pe2)
        return out.reshape(B, C, H, W)

    # --- Layout B: fully flattened (B, C*N); tiling decoupled from small/ragged C. ---
    M = C * N
    x2 = x.reshape(B, M)
    pe2 = pe_flat.reshape(1, M)
    tb = B if B < 8 else 8
    if M % 128 == 0:
        tn = _pick_lane_tile(M, tb * bytes_per, other_steps=_cdiv(B, tb))
    else:
        tn = M  # full lane extent (legal: equals array dim)
        if tb * M * bytes_per > _MAX_BLOCK_BYTES:
            # Ragged lane extent that cannot be tiled within the VMEM budget:
            # a fused XLA broadcast add is already near the HBM roofline.
            return (x + pe_flat.reshape(1, C, H, W)).astype(out_dtype)
    nj = _cdiv(M, tn)
    nb = _cdiv(B, tb)
    out = pl.pallas_call(
        _add_pe_kernel,
        out_shape=jax.ShapeDtypeStruct((B, M), out_dtype),
        grid=(nj, nb),   # pe block index constant over inner batch axis
        in_specs=[
            pl.BlockSpec((tb, tn), lambda j, b: (b, j)),
            pl.BlockSpec((1, tn), lambda j, b: (0, j)),             # pe reused over batch
        ],
        out_specs=pl.BlockSpec((tb, tn), lambda j, b: (b, j)),
        input_output_aliases=alias,
        cost_estimate=cost,
        compiler_params=cparams,
    )(x2, pe2)
    return out.reshape(B, C, H, W)


# ----------------------------- seq-mode wrapper --------------------------------

def positional_encoding_seq(x, pe_row, out_dtype):
    """x: (S, B, D), pe_row: (S, D) float32  ->  x + pe.expand(-1, B, -1)."""
    S, B, D = x.shape
    assert pe_row.shape == (S, D)
    out_dtype = jnp.dtype(out_dtype)
    bytes_per = max(jnp.dtype(x.dtype).itemsize, out_dtype.itemsize)
    cost = _cost(x, pe_row, out_dtype)
    alias = {0: 0} if out_dtype == jnp.dtype(x.dtype) else {}

    if D % 128 == 0 and B < 8 and 8 * B * D * bytes_per <= _MAX_BLOCK_BYTES:
        # --- Layout A: flatten (S, B*D) -> lane-dense stores even for tiny B.
        # pe is replicated across B in-VMEM (in-kernel lane concat), so pe HBM
        # traffic stays S*D.
        M = B * D
        x2 = x.reshape(S, M)
        row_bytes = M * bytes_per
        ts = min(S, max(8, (_TARGET_BLOCK_BYTES // row_bytes) // 8 * 8))
        while (_cdiv(S, ts) < _MIN_GRID_STEPS and ts > 8
               and (ts // 2 // 8 * 8) * row_bytes >= _MIN_BLOCK_BYTES):
            ts = ts // 2 // 8 * 8
        ns = _cdiv(S, ts)
        out = pl.pallas_call(
            functools.partial(_add_pe_lane_tiled_kernel, reps=B),
            out_shape=jax.ShapeDtypeStruct((S, M), out_dtype),
            grid=(ns,),
            in_specs=[
                pl.BlockSpec((ts, M), lambda i: (i, 0)),
                pl.BlockSpec((ts, D), lambda i: (i, 0)),
            ],
            out_specs=pl.BlockSpec((ts, M), lambda i: (i, 0)),
            input_output_aliases=alias,
            cost_estimate=cost,
            compiler_params=pltpu.CompilerParams(
                dimension_semantics=("parallel",),
                vmem_limit_bytes=_VMEM_LIMIT_BYTES,
            ),
        )(x2, pe_row)
        return out.reshape(S, B, D)

    # --- Layout B: (S, B, D) with (ts, tb, D) blocks; tiles B when it is large. ---
    if B < 8:
        tb = B
    else:
        tb = min(B, max(8, (_TARGET_BLOCK_BYTES // max(1, D * bytes_per)) // 8 * 8))
    if tb * D * bytes_per > _MAX_BLOCK_BYTES:
        # A single minimal block would not fit the VMEM budget -> fused XLA add.
        return (x + pe_row[:, None, :]).astype(out_dtype)
    row_bytes = tb * D * bytes_per
    ts = max(1, min(S, _TARGET_BLOCK_BYTES // row_bytes))
    nb = _cdiv(B, tb)
    while (_cdiv(S, ts) * nb < _MIN_GRID_STEPS and ts > 1
           and (ts // 2) * row_bytes >= _MIN_BLOCK_BYTES):
        ts = ts // 2
    ns = _cdiv(S, ts)
    pe3 = pe_row.reshape(S, 1, D)
    return pl.pallas_call(
        _add_pe_kernel,
        out_shape=jax.ShapeDtypeStruct((S, B, D), out_dtype),
        grid=(ns, nb),   # pe block index constant over inner batch-tile axis
        in_specs=[
            pl.BlockSpec((ts, tb, D), lambda i, b: (i, b, 0)),
            pl.BlockSpec((ts, 1, D), lambda i, b: (i, 0, 0)),       # pe reused over batch
        ],
        out_specs=pl.BlockSpec((ts, tb, D), lambda i, b: (i, b, 0)),
        input_output_aliases=alias,
        cost_estimate=cost,
        compiler_params=pltpu.CompilerParams(
            dimension_semantics=("parallel", "parallel"),
            vmem_limit_bytes=_VMEM_LIMIT_BYTES,
        ),
    )(x, pe3)


# ----------------------------- module wrapper ---------------------------------

class PositionalEncoding1d:
    """JAX/Pallas port of arcworld PositionalEncoding1d."""

    def __init__(self, d_model, image_size=None, seq_len=None,
                 min_pallas_bytes=_DEFAULT_MIN_PALLAS_BYTES):
        self.min_pallas_bytes = min_pallas_bytes
        if image_size:
            self.is_seq = False
            self.pe = make_pe_image(d_model, image_size)                       # (C, H, W) f32
            self.pe_flat = self.pe.reshape(d_model, image_size * image_size)   # (C, H*W) f32
        elif seq_len:
            self.is_seq = True
            self.pe = make_pe_seq(d_model, seq_len)                            # (S, 1, D) f32
            self.pe_row = self.pe.reshape(seq_len, d_model)                    # (S, D) f32
        else:
            raise ValueError

    def __call__(self, seq):
        out_dtype = jnp.promote_types(seq.dtype, jnp.float32)
        nbytes = seq.size * jnp.dtype(seq.dtype).itemsize
        if nbytes < self.min_pallas_bytes:
            # Tiny tensors: launch/per-step overhead dominates and the custom
            # call blocks XLA fusion -> plain broadcast add.
            if self.is_seq:
                return (seq + self.pe).astype(out_dtype)
            return (seq + self.pe[None]).astype(out_dtype)
        if self.is_seq:
            return positional_encoding_seq(seq, self.pe_row, out_dtype)
        return positional_encoding_image(seq, self.pe_flat, out_dtype)


# ----------------------------- demo / check -----------------------------------

if __name__ == "__main__":
    key = jax.random.PRNGKey(0)
    k1, k2 = jax.random.split(key)

    # Image mode: batch=2, d_model(channels)=4, image_size=16 -> x (2, 4, 16, 16) NCHW.
    B, C, HW = 2, 4, 16
    x_img = jax.random.normal(k1, (B, C, HW, HW), dtype=jnp.float32)
    mod_img = PositionalEncoding1d(d_model=C, image_size=HW, min_pallas_bytes=0)
    ref_img = jax.block_until_ready(x_img + mod_img.pe[None])
    out_img = jax.block_until_ready(mod_img(x_img))
    assert out_img.shape == x_img.shape and out_img.dtype == jnp.float32
    assert jnp.allclose(out_img, ref_img, atol=1e-6), "image-mode mismatch"

    # Seq mode: seq_len=8, batch=2, d_model=32 -> x (8, 2, 32) seq-first.
    S, Bs, D = 8, 2, 32
    x_seq = jax.random.normal(k2, (S, Bs, D), dtype=jnp.float32)
    mod_seq = PositionalEncoding1d(d_model=D, seq_len=S, min_pallas_bytes=0)
    ref_seq = jax.block_until_ready(x_seq + jnp.broadcast_to(mod_seq.pe, (S, Bs, D)))
    out_seq = jax.block_until_ready(mod_seq(x_seq))
    assert out_seq.shape == x_seq.shape and out_seq.dtype == jnp.float32
    assert jnp.allclose(out_seq, ref_seq, atol=1e-6), "seq-mode mismatch"

    print("KERNEL_OK")
</pallas_src>

<mosaic_0001>
module attributes {stable_mosaic.version = 11 : i64} {
  func.func @_add_pe_kernel(%arg0: i32, %arg1: i32, %arg2: memref<2x1024xf32, #tpu.memory_space<vmem>>, %arg3: memref<1x1024xf32, #tpu.memory_space<vmem>>, %arg4: memref<2x1024xf32, #tpu.memory_space<vmem>>) attributes {dimension_semantics = [#tpu.dimension_semantics<parallel>, #tpu.dimension_semantics<parallel>], iteration_bounds = array<i64: 1, 1>, scalar_prefetch = 0 : i64, scratch_operands = 0 : i64, tpu.core_type = #tpu.core_type<tc>, window_params = [{transform_indices = @transform_0, window_bounds = array<i64: 2, 1024>}, {transform_indices = @transform_1, window_bounds = array<i64: 1, 1024>}, {transform_indices = @transform_2, window_bounds = array<i64: 2, 1024>}]} {
    %c0 = arith.constant 0 : index
    %c0_0 = arith.constant 0 : index
    %0 = vector.load %arg2[%c0, %c0_0] : memref<2x1024xf32, #tpu.memory_space<vmem>>, vector<2x1024xf32>
    %c0_1 = arith.constant 0 : index
    %c0_2 = arith.constant 0 : index
    %1 = vector.load %arg3[%c0_1, %c0_2] : memref<1x1024xf32, #tpu.memory_space<vmem>>, vector<1x1024xf32>
    %2 = vector.broadcast %1 : vector<1x1024xf32> to vector<2x1024xf32>
    %3 = arith.addf %0, %2 : vector<2x1024xf32>
    %c0_3 = arith.constant 0 : index
    %c0_4 = arith.constant 0 : index
    %4 = vector.load %arg4[%c0_3, %c0_4] : memref<2x1024xf32, #tpu.memory_space<vmem>>, vector<2x1024xf32>
    tpu.vector_store %arg4[%c0_3, %c0_4], %3 {strides = array<i32>} : memref<2x1024xf32, #tpu.memory_space<vmem>>, vector<2x1024xf32>,
    return
  }
  func.func @transform_0(%arg0: i32, %arg1: i32) -> (i32, i32) {
    %c0_i32 = arith.constant 0 : i32
    return %arg1, %arg0 : i32, i32
  }
  func.func @transform_1(%arg0: i32, %arg1: i32) -> (i32, i32) {
    %c0_i32 = arith.constant 0 : i32
    %c0_i32_0 = arith.constant 0 : i32
    return %c0_i32, %arg0 : i32, i32
  }
  func.func @transform_2(%arg0: i32, %arg1: i32) -> (i32, i32) {
    %c0_i32 = arith.constant 0 : i32
    return %arg1, %arg0 : i32, i32
  }
}

</mosaic_0001>

<llo_original>
// kernel: tpu_custom_call.1
$region0: #{tpu_custom_call.1}
  #allocation0 [shape = 'u32[]', space=smem, size = 0x4, offset = 0x4, fixed_abs, tag = 'smem constant byte address 0x4 - core index']
  #allocation1 [shape = 'u32[144,128]{1,0:T(1,128)}', space=vmem, size = 0x12000, scoped, tag = 'internal scratch']
  %s0 = inlined_call_operand.hbm [shape: f32[2,1024], index: 0, kind: input, shape index: {}, may-alias: {0,2}]
  %s1 = inlined_call_operand.vmem [shape: f32[1,1024], index: 1, kind: input, shape index: {}]
  %s2 = inlined_call_operand.hbm [shape: f32[2,1024], index: 2, kind: output, shape index: {}, may-alias: {0,2}]
  %s3 = sld [smem:[#allocation0]]
  $region22: #{tpu_custom_call.1} parent=0
    _
  %s5 = ssub.s32 1, %s3
  %s6 = scalar_select 0, %s5, %s3
  $region1: #{tpu_custom_call.1} parent=0
    #allocation2 [shape = 'u8[8192]{0}', space=vmem, size = 0x2000, scoped, tag = 'input window, operand 0, single buffered']
    #allocation3 [shape = 's32[1]{0}', space=sflag, size = 0x4, scoped, tag = 'scoped memory for tpu_custom_call.1']
    #allocation4 [shape = 's32[1]{0}', space=sflag, size = 0x4, scoped, tag = 'scoped memory for tpu_custom_call.1']
    #allocation5 [shape = 'u8[8192]{0}', space=vmem, size = 0x2000, scoped, tag = 'output window, operand 0, single buffered']
    %7 = vsyncpa [#allocation3], 0
    %8 = vsyncpa [#allocation4], 0
    // Predicated region
    $region2: #{tpu_custom_call.1} parent=1 // pred_check
      _
    $region3: #{tpu_custom_call.1} parent=1 // pred_check_branch
      %10 = sbr.rel (0) target = $region5
    $region4: #{tpu_custom_call.1} parent=1 // pred_region
      %s12 = ssub.s32 256, 256
      %13 = vsyncadd [#allocation3], %s12
      %s15 = sshll.u32 [#allocation2], 4
      %s16 = int_to_ptr.vmem [resolvable:$true] %s15
      %18 = dma.hbm_to_vmem [thread:$0]  %s0, 256, %s16, [#allocation3]
    $region5: #{tpu_custom_call.1} parent=1 // pred_fallthru
      _
    // Predicated region
    $region6: #{tpu_custom_call.1} parent=1 // pred_check
      _
    $region7: #{tpu_custom_call.1} parent=1 // pred_check_branch
      %20 = sbr.rel (0) target = $region9
    $region8: #{tpu_custom_call.1} parent=1 // pred_region
      _
    $region9: #{tpu_custom_call.1} parent=1 // pred_fallthru
      _
    // Predicated region
    $region10: #{tpu_custom_call.1} parent=1 // pred_check
      _
    $region11: #{tpu_custom_call.1} parent=1 // pred_check_branch
      %22 = sbr.rel (0) target = $region13
    $region12: #{tpu_custom_call.1} parent=1 // pred_region
      %23 = dma.done [#allocation3], 256
    $region13: #{tpu_custom_call.1} parent=1 // pred_fallthru
      _
    %v24 = vld [vmem:[#allocation2] sm:$0xff]
    %v25 = vld [vmem:[#allocation2 + $0x8] sm:$0xff]
    %v26 = vld [vmem:[%s1] sm:$0xff]
    %v28 = vlaneseq
    %v29 = vshrl.u32 %v28, 7
    %v30 = vsub.s32 0, %v29
    %v31 = vrot.slane %v26, %v30
    %v32 = vlaneseq
    %v33 = vshrl.u32 %v32, 7
    %v34 = vsub.s32 1, %v33
    %v35 = vrot.slane %v26, %v34
    %v36 = vlaneseq
    %v37 = vshrl.u32 %v36, 7
    %v38 = vsub.s32 2, %v37
    %v39 = vrot.slane %v26, %v38
    %v40 = vlaneseq
    %v41 = vshrl.u32 %v40, 7
    %v42 = vsub.s32 3, %v41
    %v43 = vrot.slane %v26, %v42
    %v44 = vlaneseq
    %v45 = vshrl.u32 %v44, 7
    %v46 = vsub.s32 4, %v45
    %v47 = vrot.slane %v26, %v46
    %v48 = vlaneseq
    %v49 = vshrl.u32 %v48, 7
    %v50 = vsub.s32 5, %v49
    %v51 = vrot.slane %v26, %v50
    %v52 = vlaneseq
    %v53 = vshrl.u32 %v52, 7
    %v54 = vsub.s32 6, %v53
    %v55 = vrot.slane %v26, %v54
    %v56 = vlaneseq
    %v57 = vshrl.u32 %v56, 7
    %v58 = vsub.s32 7, %v57
    %v59 = vrot.slane %v26, %v58
    %v60 = vcombine.low %v31, %v35
    %v61 = vcombine.low %v39, %v43
    %v63 = vunpack.c.l.s4 1983009808
    %v64 = vunpack.c.0.s8 %v63
    %v65 = vlaneseq
    %v66 = vshrl.u32 %v65, 7
    %v67 = vsub.s32 %v64, %v66
    %v68 = vrot.slane %v60, %v67
    %v70 = vunpack.c.l.s4 1983009808
    %v71 = vunpack.c.0.s8 %v70
    %v72 = vlaneseq
    %v73 = vshrl.u32 %v72, 7
    %v74 = vsub.s32 %v71, %v73
    %v75 = vrot.slane %v61, %v74
    %v76 = vcombine.low %v68, %v75
    %v77 = vcombine.low %v47, %v51
    %v78 = vcombine.low %v55, %v59
    %v80 = vunpack.c.l.s4 1983009808
    %v81 = vunpack.c.0.s8 %v80
    %v82 = vlaneseq
    %v83 = vshrl.u32 %v82, 7
    %v84 = vsub.s32 %v81, %v83
    %v85 = vrot.slane %v77, %v84
    %v87 = vunpack.c.l.s4 1983009808
    %v88 = vunpack.c.0.s8 %v87
    %v89 = vlaneseq
    %v90 = vshrl.u32 %v89, 7
    %v91 = vsub.s32 %v88, %v90
    %v92 = vrot.slane %v78, %v91
    %v93 = vcombine.low %v85, %v92
    %v96 = vadd.f32 %v24, %v76
    %v97 = vadd.f32 %v25, %v93
    %98 = vst [vmem:[#allocation5] sm:$0xff] %v96
    %99 = vst [vmem:[#allocation5 + $0x8] sm:$0xff] %v97
    // Predicated region
    $region14: #{tpu_custom_call.1} parent=1 // pred_check
      _
    $region15: #{tpu_custom_call.1} parent=1 // pred_check_branch
      %101 = sbr.rel (0) target = $region17
    $region16: #{tpu_custom_call.1} parent=1 // pred_region
      %s103 = ssub.s32 256, 256
      %104 = vsyncadd [#allocation4], %s103
      %s106 = sshll.u32 [#allocation5], 4
      %s107 = int_to_ptr.vmem [resolvable:$true] %s106
      %109 = dma.vmem_to_hbm [thread:$0]  %s107, 256, %s2, [#allocation4]
    $region17: #{tpu_custom_call.1} parent=1 // pred_fallthru
      _
    // Predicated region
    $region18: #{tpu_custom_call.1} parent=1 // pred_check
      _
    $region19: #{tpu_custom_call.1} parent=1 // pred_check_branch
      %111 = sbr.rel (0) target = $region21
    $region20: #{tpu_custom_call.1} parent=1 // pred_region
      %112 = dma.done [#allocation4], 256
    $region21: #{tpu_custom_call.1} parent=1 // pred_fallthru
      _
    %113 = vsyncpa [#allocation3], 1
    %114 = vsyncpa [#allocation4], 1

</llo_original>
